<compile_context>
chip_gen: v7x
topology: tpu7x:2x2x1
jax: 0.10.0
libtpu: 0.0.40
codegen_flags: <defaults>
</compile_context>

<pallas_src>
import functools
import math

import jax
import jax.numpy as jnp
from jax import lax
from jax.experimental import pallas as pl
from jax.experimental.pallas import tpu as pltpu


def _round_up(x, m):
    return (x + m - 1) // m * m


def _block_kernel(x_ref, ln_ref, w1_ref, b1_ref, out_ref, *, d_valid):
    """One (TM, Dp) token tile: out = h1 + sum_c gelu(LN_xff(h1) @ W1_c + b1_c),
    where h1 = LN_ff(LN_start(x))."""
    x = x_ref[...].astype(jnp.float32)                      # (TM, Dp)
    dp = x.shape[-1]
    inv_d = jnp.float32(1.0 / d_valid)
    eps = jnp.float32(1e-5)

    if d_valid == dp:
        mask = None
    else:
        # Valid-lane mask: padded feature lanes must not pollute LayerNorm stats.
        mask = (lax.broadcasted_iota(jnp.int32, (1, dp), 1) < d_valid).astype(jnp.float32)

    def layernorm(v, g, b):
        if mask is None:
            mu = jnp.mean(v, axis=-1, keepdims=True)
            diff = v - mu
            var = jnp.mean(diff * diff, axis=-1, keepdims=True)   # biased, like torch
        else:
            mu = jnp.sum(v * mask, axis=-1, keepdims=True) * inv_d
            diff = (v - mu) * mask
            var = jnp.sum(diff * diff, axis=-1, keepdims=True) * inv_d
        return (v - mu) * lax.rsqrt(var + eps) * g + b

    # Packed LN params, rows: [g_start, b_start, g_ff, b_ff, g_xff, b_xff, 0, 0]
    g_start, b_start = ln_ref[0:1, :], ln_ref[1:2, :]
    g_ff, b_ff = ln_ref[2:3, :], ln_ref[3:4, :]
    g_xff, b_xff = ln_ref[4:5, :], ln_ref[5:6, :]

    h1 = layernorm(layernorm(x, g_start, b_start), g_ff, b_ff)    # ln.start -> ln.ff
    x2 = layernorm(h1, g_xff, b_xff).astype(w1_ref.dtype)         # ln.xff, bf16 for MXU

    # Boom shortcut: per-chunk matmul + GELU accumulated into a (TM, Dp) buffer.
    n_chunks = w1_ref.shape[0]                                    # H // D, small
    inv_sqrt2 = jnp.float32(1.0 / math.sqrt(2.0))
    acc = jnp.zeros(x.shape, jnp.float32)
    for c in range(n_chunks):                                     # static unroll
        y = jnp.dot(x2, w1_ref[c], preferred_element_type=jnp.float32) + b1_ref[c]
        # exact-erf GELU (torch nn.GELU default); tanh-approx would move work to EUP
        acc = acc + 0.5 * y * (1.0 + lax.erf(y * inv_sqrt2))

    out_ref[...] = (h1 + acc).astype(out_ref.dtype)


def _choose_tile_and_vmem(m, dp, n_chunks):
    """Pick a token-tile size and a VMEM budget that fits v5e/v6e and v7x."""
    resident = 2 * (n_chunks * dp * dp * 2      # W1 (bf16), double-buffered
                    + n_chunks * dp * 4         # b1 (f32)
                    + 8 * dp * 4)               # packed LN params

    def est(tm):
        io = 2 * 2 * tm * dp * 4                # in + out tiles, double-buffered
        live = 5 * tm * dp * 4                  # h1/x2/acc/y-style intermediates
        return resident + io + live

    tm = min(512, _round_up(m, 8))
    while tm > 8 and est(tm) > 24 * (1 << 20):  # keep well under v7x's 32 MiB scoped default
        tm //= 2
    tm = max(8, (tm // 8) * 8)
    vmem_limit = int(min(max(est(tm) * 3 // 2, 16 * (1 << 20)), 48 * (1 << 20)))
    return tm, vmem_limit


def block_forward(h, params):
    """h: (S, B, D) float32. Returns (h_out, new_mem, new_hidden) like Block.forward."""
    S, B, D = h.shape
    w1 = params["w1"]                     # (D, H), logical (transpose of torch's ff1.weight)
    b1 = params["b1"]                     # (H,)
    H = w1.shape[1]
    assert H % D == 0
    C = H // D

    Dp = _round_up(D, 128)                # lane-dense feature dim
    M = S * B
    TM, vmem_limit = _choose_tile_and_vmem(M, Dp, C)
    Mp = _round_up(M, TM)

    # ---- wrapper-side layout plumbing (pad / pack / chunk / cast) ----
    x2d = jnp.pad(h.reshape(M, D).astype(jnp.float32), ((0, Mp - M), (0, Dp - D)))

    ln_rows = jnp.stack([params["g_start"], params["b_start"],
                         params["g_ff"], params["b_ff"],
                         params["g_xff"], params["b_xff"]], axis=0)          # (6, D)
    ln_pack = jnp.zeros((8, Dp), jnp.float32).at[:6, :D].set(ln_rows)

    # W1 -> (C, D, D) per-chunk, zero-padded to (C, Dp, Dp), bf16 operands for the MXU.
    w1_chunks = w1.reshape(D, C, D).transpose(1, 0, 2)
    w1_chunks = jnp.pad(w1_chunks, ((0, 0), (0, Dp - D), (0, Dp - D))).astype(jnp.bfloat16)
    b1_chunks = jnp.pad(b1.reshape(C, 1, D).astype(jnp.float32),
                        ((0, 0), (0, 0), (0, Dp - D)))

    grid = (Mp // TM,)
    out2d = pl.pallas_call(
        functools.partial(_block_kernel, d_valid=D),
        out_shape=jax.ShapeDtypeStruct((Mp, Dp), h.dtype),
        grid=grid,
        in_specs=[
            pl.BlockSpec((TM, Dp), lambda i: (i, 0)),        # x tile (pipelined)
            pl.BlockSpec((8, Dp), lambda i: (0, 0)),         # packed LN params (resident)
            pl.BlockSpec((C, Dp, Dp), lambda i: (0, 0, 0)),  # W1 chunks (resident)
            pl.BlockSpec((C, 1, Dp), lambda i: (0, 0, 0)),   # b1 chunks (resident)
        ],
        out_specs=pl.BlockSpec((TM, Dp), lambda i: (i, 0)),
        compiler_params=pltpu.CompilerParams(
            dimension_semantics=("parallel",),               # shard tiles across v7x's 2 TCs
            vmem_limit_bytes=vmem_limit,
        ),
    )(x2d, ln_pack, w1_chunks, b1_chunks)

    h_out = out2d[:M, :D].reshape(S, B, D)
    new_mem = jnp.ones((0,), dtype=h.dtype)                          # torch.ones(0)
    new_hidden = (jnp.ones((0,), dtype=h.dtype), jnp.ones((0,), dtype=h.dtype))
    return h_out, new_mem, new_hidden


def init_params(key, input_dim, ff_dim):
    """Deterministic synthetic parameters matching Block(input_dim, hidden_dim, ff_dim)."""
    hidden = int(ff_dim * 2)              # Boom hidden_dim
    assert hidden % input_dim == 0
    k1, k2 = jax.random.split(key)
    bound = 1.0 / math.sqrt(input_dim)    # torch nn.Linear default init
    w1 = jax.random.uniform(k1, (input_dim, hidden), jnp.float32, -bound, bound)
    b1 = jax.random.uniform(k2, (hidden,), jnp.float32, -bound, bound)
    ones = jnp.ones((input_dim,), jnp.float32)
    zeros = jnp.zeros((input_dim,), jnp.float32)
    return {
        "g_start": ones, "b_start": zeros,
        "g_ff": ones, "b_ff": zeros,
        "g_xff": ones, "b_xff": zeros,
        "w1": w1, "b1": b1,
    }


def _reference(h, params, matmul_dtype=jnp.float32):
    """Pure-JAX reference of the same math (matmul_dtype mirrors the kernel's bf16 operands)."""
    def layernorm(v, g, b, eps=1e-5):
        mu = jnp.mean(v, axis=-1, keepdims=True)
        var = jnp.mean((v - mu) ** 2, axis=-1, keepdims=True)
        return (v - mu) * lax.rsqrt(var + eps) * g + b

    x = h.astype(jnp.float32)
    h0 = layernorm(x, params["g_start"], params["b_start"])
    h1 = layernorm(h0, params["g_ff"], params["b_ff"])
    x2 = layernorm(h1, params["g_xff"], params["b_xff"])
    a = x2.astype(matmul_dtype)
    w = params["w1"].astype(matmul_dtype)
    y = jnp.dot(a, w, preferred_element_type=jnp.float32) + params["b1"]
    y = 0.5 * y * (1.0 + lax.erf(y / jnp.sqrt(2.0)))
    D = x.shape[-1]
    z = y.reshape(y.shape[:-1] + (-1, D)).sum(axis=-2)
    return h1 + z


if __name__ == "__main__":
    key = jax.random.PRNGKey(0)
    kx, kp = jax.random.split(key)

    seq, batch, input_dim, ff_dim = 8, 2, 32, 64      # Boom hidden = 2*ff_dim = 128
    h = jax.random.normal(kx, (seq, batch, input_dim), dtype=jnp.float32)
    params = init_params(kp, input_dim, ff_dim)

    h_out, new_mem, new_hidden = block_forward(h, params)
    jax.block_until_ready(h_out)

    ref_bf16 = _reference(h, params, matmul_dtype=jnp.bfloat16)   # same bf16-operand math
    ref_f32 = _reference(h, params, matmul_dtype=jnp.float32)     # full-f32 torch-equivalent

    assert h_out.shape == (seq, batch, input_dim)
    assert jnp.allclose(h_out, ref_bf16, atol=1e-4, rtol=1e-4), \
        float(jnp.max(jnp.abs(h_out - ref_bf16)))
    assert jnp.allclose(h_out, ref_f32, atol=3e-2, rtol=3e-2), \
        float(jnp.max(jnp.abs(h_out - ref_f32)))
    assert new_mem.shape == (0,) and new_hidden[0].shape == (0,)

    print("KERNEL_OK")
</pallas_src>

<mosaic_0001>
module attributes {stable_mosaic.version = 11 : i64} {
  func.func @_block_kernel(%arg0: i32, %arg1: memref<16x128xf32, #tpu.memory_space<vmem>>, %arg2: memref<8x128xf32, #tpu.memory_space<vmem>>, %arg3: memref<4x128x128xbf16, #tpu.memory_space<vmem>>, %arg4: memref<4x1x128xf32, #tpu.memory_space<vmem>>, %arg5: memref<16x128xf32, #tpu.memory_space<vmem>>) attributes {dimension_semantics = [#tpu.dimension_semantics<parallel>], iteration_bounds = array<i64: 1>, scalar_prefetch = 0 : i64, scratch_operands = 0 : i64, tpu.core_type = #tpu.core_type<tc>, window_params = [{transform_indices = @transform_0, window_bounds = array<i64: 16, 128>}, {pipeline_mode = #tpu.pipeline_mode<synchronous>, transform_indices = @transform_1, window_bounds = array<i64: 8, 128>}, {pipeline_mode = #tpu.pipeline_mode<synchronous>, transform_indices = @transform_2, window_bounds = array<i64: 4, 128, 128>}, {pipeline_mode = #tpu.pipeline_mode<synchronous>, transform_indices = @transform_3, window_bounds = array<i64: 4, 1, 128>}, {transform_indices = @transform_4, window_bounds = array<i64: 16, 128>}]} {
    %c0 = arith.constant 0 : index
    %c0_0 = arith.constant 0 : index
    %0 = vector.load %arg1[%c0, %c0_0] : memref<16x128xf32, #tpu.memory_space<vmem>>, vector<16x128xf32>
    %1 = tpu.iota {dimensions = array<i32: 1>} : vector<1x128xi32>
    %c32_i32 = arith.constant 32 : i32
    %2 = vector.broadcast %c32_i32 : i32 to vector<1x128xi32>
    %3 = arith.cmpi slt, %1, %2 : vector<1x128xi32>
    %4 = arith.extui %3 : vector<1x128xi1> to vector<1x128xi32>
    %5 = arith.sitofp %4 : vector<1x128xi32> to vector<1x128xf32>
    %c0_1 = arith.constant 0 : index
    %c0_2 = arith.constant 0 : index
    %6 = vector.load %arg2[%c0_1, %c0_2] : memref<8x128xf32, #tpu.memory_space<vmem>>, vector<1x128xf32>
    %c1 = arith.constant 1 : index
    %c0_3 = arith.constant 0 : index
    %7 = vector.load %arg2[%c1, %c0_3] : memref<8x128xf32, #tpu.memory_space<vmem>>, vector<1x128xf32>
    %c2 = arith.constant 2 : index
    %c0_4 = arith.constant 0 : index
    %8 = vector.load %arg2[%c2, %c0_4] : memref<8x128xf32, #tpu.memory_space<vmem>>, vector<1x128xf32>
    %c3 = arith.constant 3 : index
    %c0_5 = arith.constant 0 : index
    %9 = vector.load %arg2[%c3, %c0_5] : memref<8x128xf32, #tpu.memory_space<vmem>>, vector<1x128xf32>
    %c4 = arith.constant 4 : index
    %c0_6 = arith.constant 0 : index
    %10 = vector.load %arg2[%c4, %c0_6] : memref<8x128xf32, #tpu.memory_space<vmem>>, vector<1x128xf32>
    %c5 = arith.constant 5 : index
    %c0_7 = arith.constant 0 : index
    %11 = vector.load %arg2[%c5, %c0_7] : memref<8x128xf32, #tpu.memory_space<vmem>>, vector<1x128xf32>
    %12 = vector.broadcast %5 : vector<1x128xf32> to vector<16x128xf32>
    %13 = arith.mulf %0, %12 : vector<16x128xf32>
    %cst = arith.constant dense<0.000000e+00> : vector<16xf32>
    %14 = vector.multi_reduction <add>, %13, %cst [1] : vector<16x128xf32> to vector<16xf32>
    %15 = vector.shape_cast %14 : vector<16xf32> to vector<16x1xf32>
    %cst_8 = arith.constant 3.125000e-02 : f32
    %16 = vector.broadcast %cst_8 : f32 to vector<16x1xf32>
    %17 = arith.mulf %15, %16 : vector<16x1xf32>
    %18 = vector.broadcast %17 : vector<16x1xf32> to vector<16x128xf32>
    %19 = arith.subf %0, %18 : vector<16x128xf32>
    %20 = vector.broadcast %5 : vector<1x128xf32> to vector<16x128xf32>
    %21 = arith.mulf %19, %20 : vector<16x128xf32>
    %22 = arith.mulf %21, %21 : vector<16x128xf32>
    %cst_9 = arith.constant dense<0.000000e+00> : vector<16xf32>
    %23 = vector.multi_reduction <add>, %22, %cst_9 [1] : vector<16x128xf32> to vector<16xf32>
    %24 = vector.shape_cast %23 : vector<16xf32> to vector<16x1xf32>
    %cst_10 = arith.constant 3.125000e-02 : f32
    %25 = vector.broadcast %cst_10 : f32 to vector<16x1xf32>
    %26 = arith.mulf %24, %25 : vector<16x1xf32>
    %27 = vector.broadcast %17 : vector<16x1xf32> to vector<16x128xf32>
    %28 = arith.subf %0, %27 : vector<16x128xf32>
    %cst_11 = arith.constant 9.99999974E-6 : f32
    %29 = vector.broadcast %cst_11 : f32 to vector<16x1xf32>
    %30 = arith.addf %26, %29 : vector<16x1xf32>
    %31 = math.rsqrt %30 : vector<16x1xf32>
    %32 = vector.broadcast %31 : vector<16x1xf32> to vector<16x128xf32>
    %33 = arith.mulf %28, %32 : vector<16x128xf32>
    %34 = vector.broadcast %6 : vector<1x128xf32> to vector<16x128xf32>
    %35 = arith.mulf %33, %34 : vector<16x128xf32>
    %36 = vector.broadcast %7 : vector<1x128xf32> to vector<16x128xf32>
    %37 = arith.addf %35, %36 : vector<16x128xf32>
    %38 = vector.broadcast %5 : vector<1x128xf32> to vector<16x128xf32>
    %39 = arith.mulf %37, %38 : vector<16x128xf32>
    %cst_12 = arith.constant dense<0.000000e+00> : vector<16xf32>
    %40 = vector.multi_reduction <add>, %39, %cst_12 [1] : vector<16x128xf32> to vector<16xf32>
    %41 = vector.shape_cast %40 : vector<16xf32> to vector<16x1xf32>
    %cst_13 = arith.constant 3.125000e-02 : f32
    %42 = vector.broadcast %cst_13 : f32 to vector<16x1xf32>
    %43 = arith.mulf %41, %42 : vector<16x1xf32>
    %44 = vector.broadcast %43 : vector<16x1xf32> to vector<16x128xf32>
    %45 = arith.subf %37, %44 : vector<16x128xf32>
    %46 = vector.broadcast %5 : vector<1x128xf32> to vector<16x128xf32>
    %47 = arith.mulf %45, %46 : vector<16x128xf32>
    %48 = arith.mulf %47, %47 : vector<16x128xf32>
    %cst_14 = arith.constant dense<0.000000e+00> : vector<16xf32>
    %49 = vector.multi_reduction <add>, %48, %cst_14 [1] : vector<16x128xf32> to vector<16xf32>
    %50 = vector.shape_cast %49 : vector<16xf32> to vector<16x1xf32>
    %cst_15 = arith.constant 3.125000e-02 : f32
    %51 = vector.broadcast %cst_15 : f32 to vector<16x1xf32>
    %52 = arith.mulf %50, %51 : vector<16x1xf32>
    %53 = vector.broadcast %43 : vector<16x1xf32> to vector<16x128xf32>
    %54 = arith.subf %37, %53 : vector<16x128xf32>
    %cst_16 = arith.constant 9.99999974E-6 : f32
    %55 = vector.broadcast %cst_16 : f32 to vector<16x1xf32>
    %56 = arith.addf %52, %55 : vector<16x1xf32>
    %57 = math.rsqrt %56 : vector<16x1xf32>
    %58 = vector.broadcast %57 : vector<16x1xf32> to vector<16x128xf32>
    %59 = arith.mulf %54, %58 : vector<16x128xf32>
    %60 = vector.broadcast %8 : vector<1x128xf32> to vector<16x128xf32>
    %61 = arith.mulf %59, %60 : vector<16x128xf32>
    %62 = vector.broadcast %9 : vector<1x128xf32> to vector<16x128xf32>
    %63 = arith.addf %61, %62 : vector<16x128xf32>
    %64 = vector.broadcast %5 : vector<1x128xf32> to vector<16x128xf32>
    %65 = arith.mulf %63, %64 : vector<16x128xf32>
    %cst_17 = arith.constant dense<0.000000e+00> : vector<16xf32>
    %66 = vector.multi_reduction <add>, %65, %cst_17 [1] : vector<16x128xf32> to vector<16xf32>
    %67 = vector.shape_cast %66 : vector<16xf32> to vector<16x1xf32>
    %cst_18 = arith.constant 3.125000e-02 : f32
    %68 = vector.broadcast %cst_18 : f32 to vector<16x1xf32>
    %69 = arith.mulf %67, %68 : vector<16x1xf32>
    %70 = vector.broadcast %69 : vector<16x1xf32> to vector<16x128xf32>
    %71 = arith.subf %63, %70 : vector<16x128xf32>
    %72 = vector.broadcast %5 : vector<1x128xf32> to vector<16x128xf32>
    %73 = arith.mulf %71, %72 : vector<16x128xf32>
    %74 = arith.mulf %73, %73 : vector<16x128xf32>
    %cst_19 = arith.constant dense<0.000000e+00> : vector<16xf32>
    %75 = vector.multi_reduction <add>, %74, %cst_19 [1] : vector<16x128xf32> to vector<16xf32>
    %76 = vector.shape_cast %75 : vector<16xf32> to vector<16x1xf32>
    %cst_20 = arith.constant 3.125000e-02 : f32
    %77 = vector.broadcast %cst_20 : f32 to vector<16x1xf32>
    %78 = arith.mulf %76, %77 : vector<16x1xf32>
    %79 = vector.broadcast %69 : vector<16x1xf32> to vector<16x128xf32>
    %80 = arith.subf %63, %79 : vector<16x128xf32>
    %cst_21 = arith.constant 9.99999974E-6 : f32
    %81 = vector.broadcast %cst_21 : f32 to vector<16x1xf32>
    %82 = arith.addf %78, %81 : vector<16x1xf32>
    %83 = math.rsqrt %82 : vector<16x1xf32>
    %84 = vector.broadcast %83 : vector<16x1xf32> to vector<16x128xf32>
    %85 = arith.mulf %80, %84 : vector<16x128xf32>
    %86 = vector.broadcast %10 : vector<1x128xf32> to vector<16x128xf32>
    %87 = arith.mulf %85, %86 : vector<16x128xf32>
    %88 = vector.broadcast %11 : vector<1x128xf32> to vector<16x128xf32>
    %89 = arith.addf %87, %88 : vector<16x128xf32>
    %90 = arith.truncf %89 : vector<16x128xf32> to vector<16x128xbf16>
    %cst_22 = arith.constant 0.000000e+00 : f32
    %91 = vector.broadcast %cst_22 : f32 to vector<16x128xf32>
    %c0_23 = arith.constant 0 : index
    %c0_24 = arith.constant 0 : index
    %c0_25 = arith.constant 0 : index
    %92 = vector.load %arg3[%c0_23, %c0_24, %c0_25] : memref<4x128x128xbf16, #tpu.memory_space<vmem>>, vector<1x128x128xbf16>
    %93 = vector.shape_cast %92 : vector<1x128x128xbf16> to vector<128x128xbf16>
    %cst_26 = arith.constant dense<0.000000e+00> : vector<16x128xf32>
    %94 = tpu.matmul %90, %93, %cst_26 {dimension_numbers = #tpu.dot_dimension_numbers<[1], [0], [0], [1], [0, 0, 1, 1], [], []>} : vector<16x128xbf16>, vector<128x128xbf16>, vector<16x128xf32> -> vector<16x128xf32>
    %c0_27 = arith.constant 0 : index
    %c0_28 = arith.constant 0 : index
    %c0_29 = arith.constant 0 : index
    %95 = vector.load %arg4[%c0_27, %c0_28, %c0_29] : memref<4x1x128xf32, #tpu.memory_space<vmem>>, vector<1x1x128xf32>
    %96 = vector.shape_cast %95 : vector<1x1x128xf32> to vector<1x128xf32>
    %97 = vector.broadcast %96 : vector<1x128xf32> to vector<16x128xf32>
    %98 = arith.addf %94, %97 : vector<16x128xf32>
    %cst_30 = arith.constant 5.000000e-01 : f32
    %99 = vector.broadcast %cst_30 : f32 to vector<16x128xf32>
    %100 = arith.mulf %99, %98 : vector<16x128xf32>
    %cst_31 = arith.constant 0.707106769 : f32
    %101 = vector.broadcast %cst_31 : f32 to vector<16x128xf32>
    %102 = arith.mulf %98, %101 : vector<16x128xf32>
    %103 = math.erf %102 : vector<16x128xf32>
    %cst_32 = arith.constant 1.000000e+00 : f32
    %104 = vector.broadcast %cst_32 : f32 to vector<16x128xf32>
    %105 = arith.addf %104, %103 : vector<16x128xf32>
    %106 = arith.mulf %100, %105 : vector<16x128xf32>
    %107 = arith.addf %91, %106 : vector<16x128xf32>
    %c1_33 = arith.constant 1 : index
    %c0_34 = arith.constant 0 : index
    %c0_35 = arith.constant 0 : index
    %108 = vector.load %arg3[%c1_33, %c0_34, %c0_35] : memref<4x128x128xbf16, #tpu.memory_space<vmem>>, vector<1x128x128xbf16>
    %109 = vector.shape_cast %108 : vector<1x128x128xbf16> to vector<128x128xbf16>
    %cst_36 = arith.constant dense<0.000000e+00> : vector<16x128xf32>
    %110 = tpu.matmul %90, %109, %cst_36 {dimension_numbers = #tpu.dot_dimension_numbers<[1], [0], [0], [1], [0, 0, 1, 1], [], []>} : vector<16x128xbf16>, vector<128x128xbf16>, vector<16x128xf32> -> vector<16x128xf32>
    %c1_37 = arith.constant 1 : index
    %c0_38 = arith.constant 0 : index
    %c0_39 = arith.constant 0 : index
    %111 = vector.load %arg4[%c1_37, %c0_38, %c0_39] : memref<4x1x128xf32, #tpu.memory_space<vmem>>, vector<1x1x128xf32>
    %112 = vector.shape_cast %111 : vector<1x1x128xf32> to vector<1x128xf32>
    %113 = vector.broadcast %112 : vector<1x128xf32> to vector<16x128xf32>
    %114 = arith.addf %110, %113 : vector<16x128xf32>
    %cst_40 = arith.constant 5.000000e-01 : f32
    %115 = vector.broadcast %cst_40 : f32 to vector<16x128xf32>
    %116 = arith.mulf %115, %114 : vector<16x128xf32>
    %cst_41 = arith.constant 0.707106769 : f32
    %117 = vector.broadcast %cst_41 : f32 to vector<16x128xf32>
    %118 = arith.mulf %114, %117 : vector<16x128xf32>
    %119 = math.erf %118 : vector<16x128xf32>
    %cst_42 = arith.constant 1.000000e+00 : f32
    %120 = vector.broadcast %cst_42 : f32 to vector<16x128xf32>
    %121 = arith.addf %120, %119 : vector<16x128xf32>
    %122 = arith.mulf %116, %121 : vector<16x128xf32>
    %123 = arith.addf %107, %122 : vector<16x128xf32>
    %c2_43 = arith.constant 2 : index
    %c0_44 = arith.constant 0 : index
    %c0_45 = arith.constant 0 : index
    %124 = vector.load %arg3[%c2_43, %c0_44, %c0_45] : memref<4x128x128xbf16, #tpu.memory_space<vmem>>, vector<1x128x128xbf16>
    %125 = vector.shape_cast %124 : vector<1x128x128xbf16> to vector<128x128xbf16>
    %cst_46 = arith.constant dense<0.000000e+00> : vector<16x128xf32>
    %126 = tpu.matmul %90, %125, %cst_46 {dimension_numbers = #tpu.dot_dimension_numbers<[1], [0], [0], [1], [0, 0, 1, 1], [], []>} : vector<16x128xbf16>, vector<128x128xbf16>, vector<16x128xf32> -> vector<16x128xf32>
    %c2_47 = arith.constant 2 : index
    %c0_48 = arith.constant 0 : index
    %c0_49 = arith.constant 0 : index
    %127 = vector.load %arg4[%c2_47, %c0_48, %c0_49] : memref<4x1x128xf32, #tpu.memory_space<vmem>>, vector<1x1x128xf32>
    %128 = vector.shape_cast %127 : vector<1x1x128xf32> to vector<1x128xf32>
    %129 = vector.broadcast %128 : vector<1x128xf32> to vector<16x128xf32>
    %130 = arith.addf %126, %129 : vector<16x128xf32>
    %cst_50 = arith.constant 5.000000e-01 : f32
    %131 = vector.broadcast %cst_50 : f32 to vector<16x128xf32>
    %132 = arith.mulf %131, %130 : vector<16x128xf32>
    %cst_51 = arith.constant 0.707106769 : f32
    %133 = vector.broadcast %cst_51 : f32 to vector<16x128xf32>
    %134 = arith.mulf %130, %133 : vector<16x128xf32>
    %135 = math.erf %134 : vector<16x128xf32>
    %cst_52 = arith.constant 1.000000e+00 : f32
    %136 = vector.broadcast %cst_52 : f32 to vector<16x128xf32>
    %137 = arith.addf %136, %135 : vector<16x128xf32>
    %138 = arith.mulf %132, %137 : vector<16x128xf32>
    %139 = arith.addf %123, %138 : vector<16x128xf32>
    %c3_53 = arith.constant 3 : index
    %c0_54 = arith.constant 0 : index
    %c0_55 = arith.constant 0 : index
    %140 = vector.load %arg3[%c3_53, %c0_54, %c0_55] : memref<4x128x128xbf16, #tpu.memory_space<vmem>>, vector<1x128x128xbf16>
    %141 = vector.shape_cast %140 : vector<1x128x128xbf16> to vector<128x128xbf16>
    %cst_56 = arith.constant dense<0.000000e+00> : vector<16x128xf32>
    %142 = tpu.matmul %90, %141, %cst_56 {dimension_numbers = #tpu.dot_dimension_numbers<[1], [0], [0], [1], [0, 0, 1, 1], [], []>} : vector<16x128xbf16>, vector<128x128xbf16>, vector<16x128xf32> -> vector<16x128xf32>
    %c3_57 = arith.constant 3 : index
    %c0_58 = arith.constant 0 : index
    %c0_59 = arith.constant 0 : index
    %143 = vector.load %arg4[%c3_57, %c0_58, %c0_59] : memref<4x1x128xf32, #tpu.memory_space<vmem>>, vector<1x1x128xf32>
    %144 = vector.shape_cast %143 : vector<1x1x128xf32> to vector<1x128xf32>
    %145 = vector.broadcast %144 : vector<1x128xf32> to vector<16x128xf32>
    %146 = arith.addf %142, %145 : vector<16x128xf32>
    %cst_60 = arith.constant 5.000000e-01 : f32
    %147 = vector.broadcast %cst_60 : f32 to vector<16x128xf32>
    %148 = arith.mulf %147, %146 : vector<16x128xf32>
    %cst_61 = arith.constant 0.707106769 : f32
    %149 = vector.broadcast %cst_61 : f32 to vector<16x128xf32>
    %150 = arith.mulf %146, %149 : vector<16x128xf32>
    %151 = math.erf %150 : vector<16x128xf32>
    %cst_62 = arith.constant 1.000000e+00 : f32
    %152 = vector.broadcast %cst_62 : f32 to vector<16x128xf32>
    %153 = arith.addf %152, %151 : vector<16x128xf32>
    %154 = arith.mulf %148, %153 : vector<16x128xf32>
    %155 = arith.addf %139, %154 : vector<16x128xf32>
    %156 = arith.addf %63, %155 : vector<16x128xf32>
    %c0_63 = arith.constant 0 : index
    %c0_64 = arith.constant 0 : index
    %157 = vector.load %arg5[%c0_63, %c0_64] : memref<16x128xf32, #tpu.memory_space<vmem>>, vector<16x128xf32>
    tpu.vector_store %arg5[%c0_63, %c0_64], %156 {strides = array<i32>} : memref<16x128xf32, #tpu.memory_space<vmem>>, vector<16x128xf32>,
    return
  }
  func.func @transform_0(%arg0: i32) -> (i32, i32) {
    %c0_i32 = arith.constant 0 : i32
    %c0_i32_0 = arith.constant 0 : i32
    return %arg0, %c0_i32 : i32, i32
  }
  func.func @transform_1(%arg0: i32) -> (i32, i32) {
    %c0_i32 = arith.constant 0 : i32
    %c0_i32_0 = arith.constant 0 : i32
    %c0_i32_1 = arith.constant 0 : i32
    return %c0_i32, %c0_i32_0 : i32, i32
  }
  func.func @transform_2(%arg0: i32) -> (i32, i32, i32) {
    %c0_i32 = arith.constant 0 : i32
    %c0_i32_0 = arith.constant 0 : i32
    %c0_i32_1 = arith.constant 0 : i32
    %c0_i32_2 = arith.constant 0 : i32
    return %c0_i32, %c0_i32_0, %c0_i32_1 : i32, i32, i32
  }
  func.func @transform_3(%arg0: i32) -> (i32, i32, i32) {
    %c0_i32 = arith.constant 0 : i32
    %c0_i32_0 = arith.constant 0 : i32
    %c0_i32_1 = arith.constant 0 : i32
    %c0_i32_2 = arith.constant 0 : i32
    return %c0_i32, %c0_i32_0, %c0_i32_1 : i32, i32, i32
  }
  func.func @transform_4(%arg0: i32) -> (i32, i32) {
    %c0_i32 = arith.constant 0 : i32
    %c0_i32_0 = arith.constant 0 : i32
    return %arg0, %c0_i32 : i32, i32
  }
}

</mosaic_0001>

<llo_original>
// kernel: tpu_custom_call.1
$region0: #{tpu_custom_call.1}
  #allocation0 [shape = 'u32[]', space=smem, size = 0x4, offset = 0x4, fixed_abs, tag = 'smem constant byte address 0x4 - core index']
  #allocation1 [shape = 'u32[144,128]{1,0:T(1,128)}', space=vmem, size = 0x12000, scoped, tag = 'internal scratch']
  %s0 = inlined_call_operand.hbm [shape: f32[16,128], index: 0, kind: input, shape index: {}]
  %s1 = inlined_call_operand.hbm [shape: f32[8,128], index: 1, kind: input, shape index: {}]
  %s2 = inlined_call_operand.hbm [shape: bf16[4,128,128], index: 2, kind: input, shape index: {}]
  %s3 = inlined_call_operand.vmem [shape: f32[4,1,128], index: 3, kind: input, shape index: {}]
  %s4 = inlined_call_operand.hbm [shape: f32[16,128], index: 4, kind: output, shape index: {}]
  %s5 = sld [smem:[#allocation0]]
  $region38: #{tpu_custom_call.1} parent=0
    _
  %s7 = ssub.s32 1, %s5
  %s8 = scalar_select 0, %s7, %s5
  $region1: #{tpu_custom_call.1} parent=0
    #allocation2 [shape = 'u8[8192]{0}', space=vmem, size = 0x2000, scoped, tag = 'input window, operand 0, single buffered']
    #allocation3 [shape = 's32[1]{0}', space=sflag, size = 0x4, scoped, tag = 'scoped memory for tpu_custom_call.1']
    #allocation4 [shape = 's32[1]{0}', space=sflag, size = 0x4, scoped, tag = 'scoped memory for tpu_custom_call.1']
    #allocation5 [shape = 'u8[4096]{0}', space=vmem, size = 0x1000, scoped, tag = 'input window, operand 1, single buffered']
    #allocation6 [shape = 's32[1]{0}', space=sflag, size = 0x4, scoped, tag = 'scoped memory for tpu_custom_call.1']
    #allocation7 [shape = 'u8[131072]{0}', space=vmem, size = 0x20000, scoped, tag = 'input window, operand 2, single buffered']
    #allocation8 [shape = 'u8[8192]{0}', space=vmem, size = 0x2000, scoped, tag = 'output window, operand 0, single buffered']
    %9 = vsyncpa [#allocation3], 0
    %10 = vsyncpa [#allocation6], 0
    %11 = vsyncpa [#allocation4], 0
    // Predicated region
    $region2: #{tpu_custom_call.1} parent=1 // pred_check
      _
    $region3: #{tpu_custom_call.1} parent=1 // pred_check_branch
      %13 = sbr.rel (0) target = $region5
    $region4: #{tpu_custom_call.1} parent=1 // pred_region
      %s15 = ssub.s32 256, 256
      %16 = vsyncadd [#allocation3], %s15
      %s17 = sshll.u32 [#allocation2], 4
      %s18 = int_to_ptr.vmem [resolvable:$true] %s17
      %23 = dma.hbm_to_vmem [thread:$0]  %s0, 256, %s18, [#allocation3], 128, 128, 8
    $region5: #{tpu_custom_call.1} parent=1 // pred_fallthru
      _
    // Predicated region
    $region6: #{tpu_custom_call.1} parent=1 // pred_check
      _
    $region7: #{tpu_custom_call.1} parent=1 // pred_check_branch
      %25 = sbr.rel (0) target = $region9
    $region8: #{tpu_custom_call.1} parent=1 // pred_region
      %s27 = ssub.s32 128, 128
      %28 = vsyncadd [#allocation6], %s27
      %s30 = sshll.u32 [#allocation5], 4
      %s31 = int_to_ptr.vmem [resolvable:$true] %s30
      %33 = dma.hbm_to_vmem [thread:$0]  %s1, 128, %s31, [#allocation6]
    $region9: #{tpu_custom_call.1} parent=1 // pred_fallthru
      _
    // Predicated region
    $region10: #{tpu_custom_call.1} parent=1 // pred_check
      _
    $region11: #{tpu_custom_call.1} parent=1 // pred_check_branch
      %35 = sbr.rel (0) target = $region13
    $region12: #{tpu_custom_call.1} parent=1 // pred_region
      %s37 = ssub.s32 4096, 4096
      %38 = vsyncadd [#allocation6], %s37
      %s39 = sshll.u32 [#allocation7], 4
      %s40 = int_to_ptr.vmem [resolvable:$true] %s39
      %45 = dma.hbm_to_vmem [thread:$0]  %s2, 4096, %s40, [#allocation6], 64, 64, 4
    $region13: #{tpu_custom_call.1} parent=1 // pred_fallthru
      _
    // Predicated region
    $region14: #{tpu_custom_call.1} parent=1 // pred_check
      _
    $region15: #{tpu_custom_call.1} parent=1 // pred_check_branch
      %47 = sbr.rel (0) target = $region17
    $region16: #{tpu_custom_call.1} parent=1 // pred_region
      _
    $region17: #{tpu_custom_call.1} parent=1 // pred_fallthru
      _
    // Predicated region
    $region18: #{tpu_custom_call.1} parent=1 // pred_check
      _
    $region19: #{tpu_custom_call.1} parent=1 // pred_check_branch
      %49 = sbr.rel (0) target = $region21
    $region20: #{tpu_custom_call.1} parent=1 // pred_region
      %50 = dma.done [#allocation3], 256
    $region21: #{tpu_custom_call.1} parent=1 // pred_fallthru
      _
    // Predicated region
    $region22: #{tpu_custom_call.1} parent=1 // pred_check
      _
    $region23: #{tpu_custom_call.1} parent=1 // pred_check_branch
      %52 = sbr.rel (0) target = $region25
    $region24: #{tpu_custom_call.1} parent=1 // pred_region
      %53 = dma.done [#allocation6], 128
    $region25: #{tpu_custom_call.1} parent=1 // pred_fallthru
      _
    // Predicated region
    $region26: #{tpu_custom_call.1} parent=1 // pred_check
      _
    $region27: #{tpu_custom_call.1} parent=1 // pred_check_branch
      %55 = sbr.rel (0) target = $region29
    $region28: #{tpu_custom_call.1} parent=1 // pred_region
      %56 = dma.done [#allocation6], 4096
    $region29: #{tpu_custom_call.1} parent=1 // pred_fallthru
      _
    %v58 = vld [vmem:[#allocation2] sm:$0xff]
    %v59 = vld [vmem:[#allocation2 + $0x8] sm:$0xff]
    %v60 = vlaneseq
    %v61 = vand.u32 %v60, 127
    %vm62 = vcmp.lt.s32.totalorder %v61, 32
    %v63 = vsel %vm62, 1, 0
    %v64 = vcvt.s32.f32 %v63
    %v65 = vld [vmem:[#allocation5] sm:$0x1]
    %v66 = vld [vmem:[#allocation5 + $0x1] sm:$0x1]
    %v67 = vld [vmem:[#allocation5 + $0x2] sm:$0x1]
    %v68 = vld [vmem:[#allocation5 + $0x3] sm:$0x1]
    %v69 = vld [vmem:[#allocation5 + $0x4] sm:$0x1]
    %v70 = vld [vmem:[#allocation5 + $0x5] sm:$0x1]
    %v71 = vmul.f32 %v58, %v64
    %v72 = vmul.f32 %v59, %v64
    %73 = vadd.xlane.f32.xlu0 %v71
    %v74 = vpop.xlane.xlu0 %73
    %75 = vadd.xlane.f32.xlu0 %v72
    %v76 = vpop.xlane.xlu0 %75
    %v77 = vmul.f32 %v74, 0.03125
    %v78 = vmul.f32 %v76, 0.03125
    %v79 = vsub.f32 %v58, %v77
    %v80 = vsub.f32 %v59, %v78
    %v81 = vmul.f32 %v79, %v64
    %v82 = vmul.f32 %v80, %v64
    %v83 = vmul.f32 %v81, %v81
    %v84 = vmul.f32 %v82, %v82
    %85 = vadd.xlane.f32.xlu0 %v83
    %v86 = vpop.xlane.xlu0 %85
    %87 = vadd.xlane.f32.xlu0 %v84
    %v88 = vpop.xlane.xlu0 %87
    %v89 = vmul.f32 %v86, 0.03125
    %v90 = vmul.f32 %v88, 0.03125
    %v91 = vadd.f32 %v89, 1e-05
    %v92 = vadd.f32 %v90, 1e-05
    %v93 = vrsqrt.pop %v91
    %v94 = vrsqrt.pop %v92
    %v95 = vmul.f32 %v79, %v93
    %v96 = vmul.f32 %v80, %v94
    %v97 = vlaneseq
    %v98 = vshrl.u32 %v97, 7
    %v99 = vsub.s32 0, %v98
    %v100 = vrot.slane %v65, %v99
    %v101 = vmul.f32 %v95, %v100
    %v102 = vmul.f32 %v96, %v100
    %v103 = vlaneseq
    %v104 = vshrl.u32 %v103, 7
    %v105 = vsub.s32 0, %v104
    %v106 = vrot.slane %v66, %v105
    %v107 = vadd.f32 %v101, %v106
    %v108 = vadd.f32 %v102, %v106
    %v109 = vmul.f32 %v107, %v64
    %v110 = vmul.f32 %v108, %v64
    %111 = vadd.xlane.f32.xlu0 %v109
    %v112 = vpop.xlane.xlu0 %111
    %113 = vadd.xlane.f32.xlu0 %v110
    %v114 = vpop.xlane.xlu0 %113
    %v115 = vmul.f32 %v112, 0.03125
    %v116 = vmul.f32 %v114, 0.03125
    %v117 = vsub.f32 %v107, %v115
    %v118 = vsub.f32 %v108, %v116
    %v119 = vmul.f32 %v117, %v64
    %v120 = vmul.f32 %v118, %v64
    %v121 = vmul.f32 %v119, %v119
    %v122 = vmul.f32 %v120, %v120
    %123 = vadd.xlane.f32.xlu0 %v121
    %v124 = vpop.xlane.xlu0 %123
    %125 = vadd.xlane.f32.xlu0 %v122
    %v126 = vpop.xlane.xlu0 %125
    %v127 = vmul.f32 %v124, 0.03125
    %v128 = vmul.f32 %v126, 0.03125
    %v129 = vadd.f32 %v127, 1e-05
    %v130 = vadd.f32 %v128, 1e-05
    %v131 = vrsqrt.pop %v129
    %v132 = vrsqrt.pop %v130
    %v133 = vmul.f32 %v117, %v131
    %v134 = vmul.f32 %v118, %v132
    %v135 = vlaneseq
    %v136 = vshrl.u32 %v135, 7
    %v137 = vsub.s32 0, %v136
    %v138 = vrot.slane %v67, %v137
    %v139 = vmul.f32 %v133, %v138
    %v140 = vmul.f32 %v134, %v138
    %v141 = vlaneseq
    %v142 = vshrl.u32 %v141, 7
    %v143 = vsub.s32 0, %v142
    %v144 = vrot.slane %v68, %v143
    %v145 = vadd.f32 %v139, %v144
    %v146 = vadd.f32 %v140, %v144
    %v147 = vmul.f32 %v145, %v64
    %v148 = vmul.f32 %v146, %v64
    %149 = vadd.xlane.f32.xlu0 %v147
    %v150 = vpop.xlane.xlu0 %149
    %151 = vadd.xlane.f32.xlu0 %v148
    %v152 = vpop.xlane.xlu0 %151
    %v153 = vmul.f32 %v150, 0.03125
    %v154 = vmul.f32 %v152, 0.03125
    %v155 = vsub.f32 %v145, %v153
    %v156 = vsub.f32 %v146, %v154
    %v157 = vmul.f32 %v155, %v64
    %v158 = vmul.f32 %v156, %v64
    %v159 = vmul.f32 %v157, %v157
    %v160 = vmul.f32 %v158, %v158
    %161 = vadd.xlane.f32.xlu0 %v159
    %v162 = vpop.xlane.xlu0 %161
    %163 = vadd.xlane.f32.xlu0 %v160
    %v164 = vpop.xlane.xlu0 %163
    %v165 = vmul.f32 %v162, 0.03125
    %v166 = vmul.f32 %v164, 0.03125
    %v167 = vadd.f32 %v165, 1e-05
    %v168 = vadd.f32 %v166, 1e-05
    %v169 = vrsqrt.pop %v167
    %v170 = vrsqrt.pop %v168
    %v171 = vmul.f32 %v155, %v169
    %v172 = vmul.f32 %v156, %v170
    %v173 = vlaneseq
    %v174 = vshrl.u32 %v173, 7
    %v175 = vsub.s32 0, %v174
    %v176 = vrot.slane %v69, %v175
    %v177 = vmul.f32 %v171, %v176
    %v178 = vmul.f32 %v172, %v176
    %v179 = vlaneseq
    %v180 = vshrl.u32 %v179, 7
    %v181 = vsub.s32 0, %v180
    %v182 = vrot.slane %v70, %v181
    %v183 = vadd.f32 %v177, %v182
    %v184 = vadd.f32 %v178, %v182
    %v185 = vpack.c.bf16 %v184, %v183
    %v186 = vld [vmem:[#allocation7] sm:$0xf]
    %v187 = vld [vmem:[#allocation7 + $0x4] sm:$0xf]
    %v188 = vld [vmem:[#allocation7 + $0x8] sm:$0xf]
    %v189 = vld [vmem:[#allocation7 + $0xc] sm:$0xf]
    %v190 = vld [vmem:[#allocation7 + $0x10] sm:$0xf]
    %v191 = vld [vmem:[#allocation7 + $0x14] sm:$0xf]
    %v192 = vld [vmem:[#allocation7 + $0x18] sm:$0xf]
    %v193 = vld [vmem:[#allocation7 + $0x1c] sm:$0xf]
    %v194 = vld [vmem:[#allocation7 + $0x20] sm:$0xf]
    %v195 = vld [vmem:[#allocation7 + $0x24] sm:$0xf]
    %v196 = vld [vmem:[#allocation7 + $0x28] sm:$0xf]
    %v197 = vld [vmem:[#allocation7 + $0x2c] sm:$0xf]
    %v198 = vld [vmem:[#allocation7 + $0x30] sm:$0xf]
    %v199 = vld [vmem:[#allocation7 + $0x34] sm:$0xf]
    %v200 = vld [vmem:[#allocation7 + $0x38] sm:$0xf]
    %v201 = vld [vmem:[#allocation7 + $0x3c] sm:$0xf]
    %v202 = vld [vmem:[%s3] sm:$0x1]
    %v204 = vlaneseq
    %v205 = vshrl.u32 %v204, 7
    %v206 = vsub.s32 0, %v205
    %v207 = vrot.slane %v202, %v206
    %v225 = vunpack.c.l.b16 %v186
    %v226 = vunpack.c.l.b16 %v187
    %v227 = vunpack.c.l.b16 %v188
    %v228 = vunpack.c.l.b16 %v189
    %v229 = vunpack.c.l.b16 %v190
    %v230 = vunpack.c.l.b16 %v191
    %v231 = vunpack.c.l.b16 %v192
    %v232 = vunpack.c.l.b16 %v193
    %v233 = vunpack.c.l.b16 %v194
    %v234 = vunpack.c.l.b16 %v195
    %v235 = vunpack.c.l.b16 %v196
    %v236 = vunpack.c.l.b16 %v197
    %v237 = vunpack.c.l.b16 %v198
    %v238 = vunpack.c.l.b16 %v199
    %v239 = vunpack.c.l.b16 %v200
    %v240 = vunpack.c.l.b16 %v201
    %v241 = vpack.c.b16 %v226, %v225
    %v242 = vpack.c.b16 %v228, %v227
    %v243 = vpack.c.b16 %v230, %v229
    %v244 = vpack.c.b16 %v232, %v231
    %v245 = vpack.c.b16 %v234, %v233
    %v246 = vpack.c.b16 %v236, %v235
    %v247 = vpack.c.b16 %v238, %v237
    %v248 = vpack.c.b16 %v240, %v239
    %257 = vmatprep.subr.bf16.mxu0 0
    %258 = vmatpush1.bf16.msra.mxu0 %v241
    %259 = vmatprep.subr.bf16.mxu0 0
    %260 = vmatpush1.bf16.msra.mxu0 %v242
    %261 = vmatprep.subr.bf16.mxu0 0
    %262 = vmatpush1.bf16.msra.mxu0 %v243
    %263 = vmatprep.subr.bf16.mxu0 0
    %264 = vmatpush1.bf16.msra.mxu0 %v244
    %265 = vmatprep.subr.bf16.mxu0 0
    %266 = vmatpush1.bf16.msra.mxu0 %v245
    %267 = vmatprep.subr.bf16.mxu0 0
    %268 = vmatpush1.bf16.msra.mxu0 %v246
    %269 = vmatprep.subr.bf16.mxu0 0
    %270 = vmatpush1.bf16.msra.mxu0 %v247
    %271 = vmatprep.subr.bf16.mxu0 0
    %272 = vmatpush1.bf16.msra.mxu0 %v248
    %273 = vmatprep.subr.bf16.mxu0 0
    %274 = vmatpush1.bf16.msra.mxu0 0
    %275 = vmatprep.subr.bf16.mxu0 0
    %276 = vmatpush1.bf16.msra.mxu0 0
    %277 = vmatprep.subr.bf16.mxu0 0
    %278 = vmatpush1.bf16.msra.mxu0 0
    %279 = vmatprep.subr.bf16.mxu0 0
    %280 = vmatpush1.bf16.msra.mxu0 0
    %281 = vmatprep.subr.bf16.mxu0 0
    %282 = vmatpush1.bf16.msra.mxu0 0
    %283 = vmatprep.subr.bf16.mxu0 0
    %284 = vmatpush1.bf16.msra.mxu0 0
    %285 = vmatprep.subr.bf16.mxu0 0
    %286 = vmatpush1.bf16.msra.mxu0 0
    %287 = vmatprep.subr.bf16.mxu0 0
    %288 = vmatpush1.bf16.msra.mxu0 0
    %289 = vmatprep.mubr.bf16.mxu0 0
    %290 = vmatmul.mubr.bf16.gmra.mrb[0].mxu0 %v185
    %v291 = vpop.f32.mrb[0].mxu0
    %v292 = vadd.f32 %v207, %v291
    %v293 = vpop.f32.mrb[0].mxu0
    %v294 = vpop.f32.mrb[0].mxu0
    %v295 = vadd.f32 %v207, %v294
    %v296 = vpop.f32.mrb[0].mxu0
    %297 = vdwg.mxu0
    %v298 = vmul.f32 %v292, 0.5
    %v299 = vmul.f32 %v295, 0.5
    %v300 = vmul.f32 %v292, 0.70710677
    %v301 = vmul.f32 %v295, 0.70710677
    %v302 = verf.f32.pop %v300
    %v303 = verf.f32.pop %v301
    %v304 = vadd.f32 %v302, 1.0
    %v305 = vadd.f32 %v303, 1.0
    %v306 = vmul.f32 %v298, %v304
    %v307 = vmul.f32 %v299, %v305
    %v308 = vadd.f32 %v306, 0.0
    %v309 = vadd.f32 %v307, 0.0
    %s310 = scalar_lea.vmem [#allocation7], 64
    %v311 = vld [vmem:[%s310] sm:$0xf]
    %v312 = vld [vmem:[%s310 + $0x4] sm:$0xf]
    %v313 = vld [vmem:[%s310 + $0x8] sm:$0xf]
    %v314 = vld [vmem:[%s310 + $0xc] sm:$0xf]
    %v315 = vld [vmem:[%s310 + $0x10] sm:$0xf]
    %v316 = vld [vmem:[%s310 + $0x14] sm:$0xf]
    %v317 = vld [vmem:[%s310 + $0x18] sm:$0xf]
    %v318 = vld [vmem:[%s310 + $0x1c] sm:$0xf]
    %v319 = vld [vmem:[%s310 + $0x20] sm:$0xf]
    %v320 = vld [vmem:[%s310 + $0x24] sm:$0xf]
    %v321 = vld [vmem:[%s310 + $0x28] sm:$0xf]
    %v322 = vld [vmem:[%s310 + $0x2c] sm:$0xf]
    %v323 = vld [vmem:[%s310 + $0x30] sm:$0xf]
    %v324 = vld [vmem:[%s310 + $0x34] sm:$0xf]
    %v325 = vld [vmem:[%s310 + $0x38] sm:$0xf]
    %v326 = vld [vmem:[%s310 + $0x3c] sm:$0xf]
    %s327 = scalar_lea.vmem %s3, 1
    %v328 = vld [vmem:[%s327] sm:$0x1]
    %v330 = vlaneseq
    %v331 = vshrl.u32 %v330, 7
    %v332 = vsub.s32 0, %v331
    %v333 = vrot.slane %v328, %v332
    %v351 = vunpack.c.l.b16 %v311
    %v352 = vunpack.c.l.b16 %v312
    %v353 = vunpack.c.l.b16 %v313
    %v354 = vunpack.c.l.b16 %v314
    %v355 = vunpack.c.l.b16 %v315
    %v356 = vunpack.c.l.b16 %v316
    %v357 = vunpack.c.l.b16 %v317
    %v358 = vunpack.c.l.b16 %v318
    %v359 = vunpack.c.l.b16 %v319
    %v360 = vunpack.c.l.b16 %v320
    %v361 = vunpack.c.l.b16 %v321
    %v362 = vunpack.c.l.b16 %v322
    %v363 = vunpack.c.l.b16 %v323
    %v364 = vunpack.c.l.b16 %v324
    %v365 = vunpack.c.l.b16 %v325
    %v366 = vunpack.c.l.b16 %v326
    %v367 = vpack.c.b16 %v352, %v351
    %v368 = vpack.c.b16 %v354, %v353
    %v369 = vpack.c.b16 %v356, %v355
    %v370 = vpack.c.b16 %v358, %v357
    %v371 = vpack.c.b16 %v360, %v359
    %v372 = vpack.c.b16 %v362, %v361
    %v373 = vpack.c.b16 %v364, %v363
    %v374 = vpack.c.b16 %v366, %v365
    %383 = vmatprep.subr.bf16.mxu0 0
    %384 = vmatpush1.bf16.msra.mxu0 %v367
    %385 = vmatprep.subr.bf16.mxu0 0
    %386 = vmatpush1.bf16.msra.mxu0 %v368
    %387 = vmatprep.subr.bf16.mxu0 0
    %388 = vmatpush1.bf16.msra.mxu0 %v369
    %389 = vmatprep.subr.bf16.mxu0 0
    %390 = vmatpush1.bf16.msra.mxu0 %v370
    %391 = vmatprep.subr.bf16.mxu0 0
    %392 = vmatpush1.bf16.msra.mxu0 %v371
    %393 = vmatprep.subr.bf16.mxu0 0
    %394 = vmatpush1.bf16.msra.mxu0 %v372
    %395 = vmatprep.subr.bf16.mxu0 0
    %396 = vmatpush1.bf16.msra.mxu0 %v373
    %397 = vmatprep.subr.bf16.mxu0 0
    %398 = vmatpush1.bf16.msra.mxu0 %v374
    %399 = vmatprep.subr.bf16.mxu0 0
    %400 = vmatpush1.bf16.msra.mxu0 0
    %401 = vmatprep.subr.bf16.mxu0 0
    %402 = vmatpush1.bf16.msra.mxu0 0
    %403 = vmatprep.subr.bf16.mxu0 0
    %404 = vmatpush1.bf16.msra.mxu0 0
    %405 = vmatprep.subr.bf16.mxu0 0
    %406 = vmatpush1.bf16.msra.mxu0 0
    %407 = vmatprep.subr.bf16.mxu0 0
    %408 = vmatpush1.bf16.msra.mxu0 0
    %409 = vmatprep.subr.bf16.mxu0 0
    %410 = vmatpush1.bf16.msra.mxu0 0
    %411 = vmatprep.subr.bf16.mxu0 0
    %412 = vmatpush1.bf16.msra.mxu0 0
    %413 = vmatprep.subr.bf16.mxu0 0
    %414 = vmatpush1.bf16.msra.mxu0 0
    %415 = vmatprep.mubr.bf16.mxu0 0
    %416 = vmatmul.mubr.bf16.gmra.mrb[0].mxu0 %v185
    %v417 = vpop.f32.mrb[0].mxu0
    %v418 = vadd.f32 %v333, %v417
    %v419 = vpop.f32.mrb[0].mxu0
    %v420 = vpop.f32.mrb[0].mxu0
    %v421 = vadd.f32 %v333, %v420
    %v422 = vpop.f32.mrb[0].mxu0
    %423 = vdwg.mxu0
    %v424 = vmul.f32 %v418, 0.5
    %v425 = vmul.f32 %v421, 0.5
    %v426 = vmul.f32 %v418, 0.70710677
    %v427 = vmul.f32 %v421, 0.70710677
    %v428 = verf.f32.pop %v426
    %v429 = verf.f32.pop %v427
    %v430 = vadd.f32 %v428, 1.0
    %v431 = vadd.f32 %v429, 1.0
    %v432 = vmul.f32 %v424, %v430
    %v433 = vmul.f32 %v425, %v431
    %v434 = vadd.f32 %v308, %v432
    %v435 = vadd.f32 %v309, %v433
    %s436 = scalar_lea.vmem [#allocation7], 128
    %v437 = vld [vmem:[%s436] sm:$0xf]
    %v438 = vld [vmem:[%s436 + $0x4] sm:$0xf]
    %v439 = vld [vmem:[%s436 + $0x8] sm:$0xf]
    %v440 = vld [vmem:[%s436 + $0xc] sm:$0xf]
    %v441 = vld [vmem:[%s436 + $0x10] sm:$0xf]
    %v442 = vld [vmem:[%s436 + $0x14] sm:$0xf]
    %v443 = vld [vmem:[%s436 + $0x18] sm:$0xf]
    %v444 = vld [vmem:[%s436 + $0x1c] sm:$0xf]
    %v445 = vld [vmem:[%s436 + $0x20] sm:$0xf]
    %v446 = vld [vmem:[%s436 + $0x24] sm:$0xf]
    %v447 = vld [vmem:[%s436 + $0x28] sm:$0xf]
    %v448 = vld [vmem:[%s436 + $0x2c] sm:$0xf]
    %v449 = vld [vmem:[%s436 + $0x30] sm:$0xf]
    %v450 = vld [vmem:[%s436 + $0x34] sm:$0xf]
    %v451 = vld [vmem:[%s436 + $0x38] sm:$0xf]
    %v452 = vld [vmem:[%s436 + $0x3c] sm:$0xf]
    %s453 = scalar_lea.vmem %s3, 2
    %v454 = vld [vmem:[%s453] sm:$0x1]
    %v456 = vlaneseq
    %v457 = vshrl.u32 %v456, 7
    %v458 = vsub.s32 0, %v457
    %v459 = vrot.slane %v454, %v458
    %v477 = vunpack.c.l.b16 %v437
    %v478 = vunpack.c.l.b16 %v438
    %v479 = vunpack.c.l.b16 %v439
    %v480 = vunpack.c.l.b16 %v440
    %v481 = vunpack.c.l.b16 %v441
    %v482 = vunpack.c.l.b16 %v442
    %v483 = vunpack.c.l.b16 %v443
    %v484 = vunpack.c.l.b16 %v444
    %v485 = vunpack.c.l.b16 %v445
    %v486 = vunpack.c.l.b16 %v446
    %v487 = vunpack.c.l.b16 %v447
    %v488 = vunpack.c.l.b16 %v448
    %v489 = vunpack.c.l.b16 %v449
    %v490 = vunpack.c.l.b16 %v450
    %v491 = vunpack.c.l.b16 %v451
    %v492 = vunpack.c.l.b16 %v452
    %v493 = vpack.c.b16 %v478, %v477
    %v494 = vpack.c.b16 %v480, %v479
    %v495 = vpack.c.b16 %v482, %v481
    %v496 = vpack.c.b16 %v484, %v483
    %v497 = vpack.c.b16 %v486, %v485
    %v498 = vpack.c.b16 %v488, %v487
    %v499 = vpack.c.b16 %v490, %v489
    %v500 = vpack.c.b16 %v492, %v491
    %509 = vmatprep.subr.bf16.mxu0 0
    %510 = vmatpush1.bf16.msra.mxu0 %v493
    %511 = vmatprep.subr.bf16.mxu0 0
    %512 = vmatpush1.bf16.msra.mxu0 %v494
    %513 = vmatprep.subr.bf16.mxu0 0
    %514 = vmatpush1.bf16.msra.mxu0 %v495
    %515 = vmatprep.subr.bf16.mxu0 0
    %516 = vmatpush1.bf16.msra.mxu0 %v496
    %517 = vmatprep.subr.bf16.mxu0 0
    %518 = vmatpush1.bf16.msra.mxu0 %v497
    %519 = vmatprep.subr.bf16.mxu0 0
    %520 = vmatpush1.bf16.msra.mxu0 %v498
    %521 = vmatprep.subr.bf16.mxu0 0
    %522 = vmatpush1.bf16.msra.mxu0 %v499
    %523 = vmatprep.subr.bf16.mxu0 0
    %524 = vmatpush1.bf16.msra.mxu0 %v500
    %525 = vmatprep.subr.bf16.mxu0 0
    %526 = vmatpush1.bf16.msra.mxu0 0
    %527 = vmatprep.subr.bf16.mxu0 0
    %528 = vmatpush1.bf16.msra.mxu0 0
    %529 = vmatprep.subr.bf16.mxu0 0
    %530 = vmatpush1.bf16.msra.mxu0 0
    %531 = vmatprep.subr.bf16.mxu0 0
    %532 = vmatpush1.bf16.msra.mxu0 0
    %533 = vmatprep.subr.bf16.mxu0 0
    %534 = vmatpush1.bf16.msra.mxu0 0
    %535 = vmatprep.subr.bf16.mxu0 0
    %536 = vmatpush1.bf16.msra.mxu0 0
    %537 = vmatprep.subr.bf16.mxu0 0
    %538 = vmatpush1.bf16.msra.mxu0 0
    %539 = vmatprep.subr.bf16.mxu0 0
    %540 = vmatpush1.bf16.msra.mxu0 0
    %541 = vmatprep.mubr.bf16.mxu0 0
    %542 = vmatmul.mubr.bf16.gmra.mrb[0].mxu0 %v185
    %v543 = vpop.f32.mrb[0].mxu0
    %v544 = vadd.f32 %v459, %v543
    %v545 = vpop.f32.mrb[0].mxu0
    %v546 = vpop.f32.mrb[0].mxu0
    %v547 = vadd.f32 %v459, %v546
    %v548 = vpop.f32.mrb[0].mxu0
    %549 = vdwg.mxu0
    %v550 = vmul.f32 %v544, 0.5
    %v551 = vmul.f32 %v547, 0.5
    %v552 = vmul.f32 %v544, 0.70710677
    %v553 = vmul.f32 %v547, 0.70710677
    %v554 = verf.f32.pop %v552
    %v555 = verf.f32.pop %v553
    %v556 = vadd.f32 %v554, 1.0
    %v557 = vadd.f32 %v555, 1.0
    %v558 = vmul.f32 %v550, %v556
    %v559 = vmul.f32 %v551, %v557
    %v560 = vadd.f32 %v434, %v558
    %v561 = vadd.f32 %v435, %v559
    %s562 = scalar_lea.vmem [#allocation7], 192
    %v563 = vld [vmem:[%s562] sm:$0xf]
    %v564 = vld [vmem:[%s562 + $0x4] sm:$0xf]
    %v565 = vld [vmem:[%s562 + $0x8] sm:$0xf]
    %v566 = vld [vmem:[%s562 + $0xc] sm:$0xf]
    %v567 = vld [vmem:[%s562 + $0x10] sm:$0xf]
    %v568 = vld [vmem:[%s562 + $0x14] sm:$0xf]
    %v569 = vld [vmem:[%s562 + $0x18] sm:$0xf]
    %v570 = vld [vmem:[%s562 + $0x1c] sm:$0xf]
    %v571 = vld [vmem:[%s562 + $0x20] sm:$0xf]
    %v572 = vld [vmem:[%s562 + $0x24] sm:$0xf]
    %v573 = vld [vmem:[%s562 + $0x28] sm:$0xf]
    %v574 = vld [vmem:[%s562 + $0x2c] sm:$0xf]
    %v575 = vld [vmem:[%s562 + $0x30] sm:$0xf]
    %v576 = vld [vmem:[%s562 + $0x34] sm:$0xf]
    %v577 = vld [vmem:[%s562 + $0x38] sm:$0xf]
    %v578 = vld [vmem:[%s562 + $0x3c] sm:$0xf]
    %s579 = scalar_lea.vmem %s3, 3
    %v580 = vld [vmem:[%s579] sm:$0x1]
    %v582 = vlaneseq
    %v583 = vshrl.u32 %v582, 7
    %v584 = vsub.s32 0, %v583
    %v585 = vrot.slane %v580, %v584
    %v603 = vunpack.c.l.b16 %v563
    %v604 = vunpack.c.l.b16 %v564
    %v605 = vunpack.c.l.b16 %v565
    %v606 = vunpack.c.l.b16 %v566
    %v607 = vunpack.c.l.b16 %v567
    %v608 = vunpack.c.l.b16 %v568
    %v609 = vunpack.c.l.b16 %v569
    %v610 = vunpack.c.l.b16 %v570
    %v611 = vunpack.c.l.b16 %v571
    %v612 = vunpack.c.l.b16 %v572
    %v613 = vunpack.c.l.b16 %v573
    %v614 = vunpack.c.l.b16 %v574
    %v615 = vunpack.c.l.b16 %v575
    %v616 = vunpack.c.l.b16 %v576
    %v617 = vunpack.c.l.b16 %v577
    %v618 = vunpack.c.l.b16 %v578
    %v619 = vpack.c.b16 %v604, %v603
    %v620 = vpack.c.b16 %v606, %v605
    %v621 = vpack.c.b16 %v608, %v607
    %v622 = vpack.c.b16 %v610, %v609
    %v623 = vpack.c.b16 %v612, %v611
    %v624 = vpack.c.b16 %v614, %v613
    %v625 = vpack.c.b16 %v616, %v615
    %v626 = vpack.c.b16 %v618, %v617
    %635 = vmatprep.subr.bf16.mxu0 0
    %636 = vmatpush1.bf16.msra.mxu0 %v619
    %637 = vmatprep.subr.bf16.mxu0 0
    %638 = vmatpush1.bf16.msra.mxu0 %v620
    %639 = vmatprep.subr.bf16.mxu0 0
    %640 = vmatpush1.bf16.msra.mxu0 %v621
    %641 = vmatprep.subr.bf16.mxu0 0
    %642 = vmatpush1.bf16.msra.mxu0 %v622
    %643 = vmatprep.subr.bf16.mxu0 0
    %644 = vmatpush1.bf16.msra.mxu0 %v623
    %645 = vmatprep.subr.bf16.mxu0 0
    %646 = vmatpush1.bf16.msra.mxu0 %v624
    %647 = vmatprep.subr.bf16.mxu0 0
    %648 = vmatpush1.bf16.msra.mxu0 %v625
    %649 = vmatprep.subr.bf16.mxu0 0
    %650 = vmatpush1.bf16.msra.mxu0 %v626
    %651 = vmatprep.subr.bf16.mxu0 0
    %652 = vmatpush1.bf16.msra.mxu0 0
    %653 = vmatprep.subr.bf16.mxu0 0
    %654 = vmatpush1.bf16.msra.mxu0 0
    %655 = vmatprep.subr.bf16.mxu0 0
    %656 = vmatpush1.bf16.msra.mxu0 0
    %657 = vmatprep.subr.bf16.mxu0 0
    %658 = vmatpush1.bf16.msra.mxu0 0
    %659 = vmatprep.subr.bf16.mxu0 0
    %660 = vmatpush1.bf16.msra.mxu0 0
    %661 = vmatprep.subr.bf16.mxu0 0
    %662 = vmatpush1.bf16.msra.mxu0 0
    %663 = vmatprep.subr.bf16.mxu0 0
    %664 = vmatpush1.bf16.msra.mxu0 0
    %665 = vmatprep.subr.bf16.mxu0 0
    %666 = vmatpush1.bf16.msra.mxu0 0
    %667 = vmatprep.mubr.bf16.mxu0 0
    %668 = vmatmul.mubr.bf16.gmra.mrb[0].mxu0 %v185
    %v669 = vpop.f32.mrb[0].mxu0
    %v670 = vadd.f32 %v585, %v669
    %v671 = vpop.f32.mrb[0].mxu0
    %v672 = vpop.f32.mrb[0].mxu0
    %v673 = vadd.f32 %v585, %v672
    %v674 = vpop.f32.mrb[0].mxu0
    %675 = vdwg.mxu0
    %v676 = vmul.f32 %v670, 0.5
    %v677 = vmul.f32 %v673, 0.5
    %v678 = vmul.f32 %v670, 0.70710677
    %v679 = vmul.f32 %v673, 0.70710677
    %v680 = verf.f32.pop %v678
    %v681 = verf.f32.pop %v679
    %v682 = vadd.f32 %v680, 1.0
    %v683 = vadd.f32 %v681, 1.0
    %v684 = vmul.f32 %v676, %v682
    %v685 = vmul.f32 %v677, %v683
    %v686 = vadd.f32 %v560, %v684
    %v687 = vadd.f32 %v561, %v685
    %v688 = vadd.f32 %v145, %v686
    %v689 = vadd.f32 %v146, %v687
    %690 = vst [vmem:[#allocation8] sm:$0xff] %v688
    %691 = vst [vmem:[#allocation8 + $0x8] sm:$0xff] %v689
    // Predicated region
    $region30: #{tpu_custom_call.1} parent=1 // pred_check
      _
    $region31: #{tpu_custom_call.1} parent=1 // pred_check_branch
      %693 = sbr.rel (0) target = $region33
    $region32: #{tpu_custom_call.1} parent=1 // pred_region
      %s695 = ssub.s32 256, 256
      %696 = vsyncadd [#allocation4], %s695
      %s697 = sshll.u32 [#allocation8], 4
      %s698 = int_to_ptr.vmem [resolvable:$true] %s697
      %703 = dma.vmem_to_hbm [thread:$0]  %s698, 256, %s4, [#allocation4], 128, 128, 8
    $region33: #{tpu_custom_call.1} parent=1 // pred_fallthru
      _
    // Predicated region
    $region34: #{tpu_custom_call.1} parent=1 // pred_check
      _
    $region35: #{tpu_custom_call.1} parent=1 // pred_check_branch
      %705 = sbr.rel (0) target = $region37
    $region36: #{tpu_custom_call.1} parent=1 // pred_region
      %706 = dma.done [#allocation4], 256
    $region37: #{tpu_custom_call.1} parent=1 // pred_fallthru
      _
    %707 = vsyncpa [#allocation3], 1
    %708 = vsyncpa [#allocation6], 1
    %709 = vsyncpa [#allocation4], 1

</llo_original>
